<compile_context>
chip_gen: v7x
topology: tpu7x:2x2x1
jax: 0.10.0
libtpu: 0.0.40
codegen_flags: <defaults>
</compile_context>

<pallas_src>
import functools

import jax
import jax.numpy as jnp
from jax.experimental import pallas as pl
from jax.experimental.pallas import tpu as pltpu

EPS = 1e-5  # BatchNorm eps (PyTorch default)


# ----------------------------------------------------------------------------- roll probe
@functools.lru_cache(maxsize=None)
def _roll_signs():
    """Probe pltpu.roll's rotate-direction convention vs jnp.roll (once, tiny kernel).

    Only the depthwise-conv taps are direction sensitive (the CBN lane butterfly is a
    full cyclic-group sum and therefore sign agnostic). The probe runs a single tiny
    kernel once per process (lru_cached) and adapts the tap/shift pairing to whichever
    convention the installed jax/Mosaic uses.
    """
    x = jnp.arange(2 * 8 * 256, dtype=jnp.float32).reshape(2, 8, 256)

    def probe(x_ref, a_ref, b_ref):
        v = x_ref[...]
        a_ref[...] = pltpu.roll(v, 1, axis=1)    # sublane roll
        b_ref[...] = pltpu.roll(v, 32, axis=2)   # lane roll across a vreg boundary

    a, b = pl.pallas_call(
        probe,
        out_shape=(jax.ShapeDtypeStruct(x.shape, x.dtype),
                   jax.ShapeDtypeStruct(x.shape, x.dtype)),
    )(x)

    def sign(got, shift, axis):
        if bool(jnp.allclose(got, jnp.roll(x, shift, axis=axis))):
            return 1
        if bool(jnp.allclose(got, jnp.roll(x, -shift, axis=axis))):
            return -1
        raise AssertionError("unexpected pltpu.roll semantics")

    return sign(a, 1, 1), sign(b, 32, 2)


# ----------------------------------------------------------------------------- fused kernel
def _make_mixer_kernel(C, layers_per_step, sign_sub, sign_lane, eps=EPS):
    def kernel(x_ref, aff_ref,
               dw1_w_ref, dw1_b_ref, dw2_w_ref, dw2_b_ref,
               p1_w_ref, p1_b_ref, p2_w_ref, p2_b_ref,
               out_ref):
        N, H, WC = out_ref.shape
        W = WC // C
        inv_count = 1.0 / float(N * H * W)

        # Step 0: load the input into the resident output block. Later grid steps keep
        # reading/writing the same VMEM block (activation carry, no HBM traffic between
        # layers); HBM writeback happens once after the last layer.
        @pl.when(pl.program_id(0) == 0)
        def _():
            out_ref[...] = x_ref[...]

        def group_sum_lanes(v):
            # v[.., w*C + c] -> sum_w' v[.., w'*C + c]: per-channel sum over the W
            # lane-interleaved spatial columns. Cyclic-group sum => direction agnostic.
            if W & (W - 1) == 0:                       # log2(W) roll-and-add butterfly
                shift = C
                acc = v
                while shift < WC:
                    acc = acc + pltpu.roll(acc, shift, axis=1)
                    shift *= 2
                return acc
            acc = v                                    # generic fallback (W-1 rolls)
            for w in range(1, W):
                acc = acc + pltpu.roll(v, w * C, axis=1)
            return acc

        def cbn(y, gamma, beta):
            # Conditional BatchNorm: stats over (N, H, W) per channel; affine is folded
            # into one mul + one add per element.
            yf = y.reshape(N * H, WC)
            s = jnp.sum(yf, axis=0, keepdims=True)                 # (1, W*C)
            ss = jnp.sum(yf * yf, axis=0, keepdims=True)           # (1, W*C)
            mean = group_sum_lanes(s) * inv_count                  # (1, W*C)
            ex2 = group_sum_lanes(ss) * inv_count
            # TODO(synk): single-pass E[x^2]-mean^2 in f32; switch to a two-pass/shifted
            # variance if real activations have |mean| >> std.
            var = ex2 - mean * mean
            inv = jax.lax.rsqrt(var + eps)
            scale = gamma * inv                                    # (N, W*C)
            off = beta - mean * scale                              # (N, W*C)
            return y * scale[:, None, :] + off[:, None, :]

        def shift_h(v, dh):
            # v[n, h, l] -> v[n, (h+dh) % H, l]
            return pltpu.roll(v, (sign_sub * -dh) % H, axis=1) if dh % H else v

        def shift_w(v, dw):
            # v[n, h, w*C+c] -> v[n, h, ((w+dw) % W)*C + c]  (lane roll by dw*C wraps W)
            return pltpu.roll(v, (sign_lane * -(dw * C)) % WC, axis=2) if (dw * C) % WC else v

        def dw_conv(y, w, b):
            # circle_padding(pad=1) + 3x3 depthwise Conv2d == sum of 9 circularly shifted
            # taps (cross-correlation, like torch Conv2d). Taps are small (1,1,W*C)
            # slices broadcast inside the multiply (low vreg pressure).
            acc = jnp.broadcast_to(b[None], (N, H, WC))            # bias, broadcast once
            rows = [shift_h(y, dh) for dh in (-1, 0, 1)]           # reuse H-shifted copies
            for i in range(3):
                for j in range(3):
                    tap = w[3 * i + j:3 * i + j + 1][None]         # (1, 1, W*C)
                    acc = acc + shift_w(rows[i], j - 1) * tap
            return acc

        x = out_ref[...]                                           # (N, H, W*C) carry

        for k in range(layers_per_step):                           # statically unrolled
            a = aff_ref[k]                                         # (N, 4*W*C) precomputed
            g1, b1 = a[:, 0 * WC:1 * WC], a[:, 1 * WC:2 * WC]
            g2, b2 = a[:, 2 * WC:3 * WC], a[:, 3 * WC:4 * WC]

            # ---- sub-block 1: norm1 -> DepthwiseModule (two circular dw convs) -> skip
            y = cbn(x, g1, b1)
            y = dw_conv(y, dw1_w_ref[k], dw1_b_ref[k])
            y = dw_conv(y, dw2_w_ref[k], dw2_b_ref[k])
            x = x + y

            # ---- sub-block 2: norm2 -> 1x1 conv C->2C -> GELU -> 1x1 conv 2C->C -> skip
            # Block-diagonal (kron(I_W, W)) bf16 weights, bf16 operands, f32 accumulate.
            y = cbn(x, g2, b2)
            yf = y.reshape(N * H, WC)
            h = jnp.dot(yf.astype(jnp.bfloat16), p1_w_ref[k],
                        preferred_element_type=jnp.float32) + p1_b_ref[k]
            # TODO(synk): PyTorch nn.GELU default is erf-exact; tanh approximation used here.
            h = jax.nn.gelu(h, approximate=True)
            o = jnp.dot(h.astype(jnp.bfloat16), p2_w_ref[k],
                        preferred_element_type=jnp.float32) + p2_b_ref[k]
            x = x + o.reshape(N, H, WC)

        out_ref[...] = x

    return kernel


# ----------------------------------------------------------------------------- param prep
def _prep_layer_params(p, W):
    """Convert one block's natural-layout params to the kernel's lane-dense layouts."""
    (wg1, bg1, wb1, bb1, dw1w, dw1b, dw2w, dw2b,
     wg2, bg2, wb2, bb2, p1w, p1b, p2w, p2b) = p
    tile = lambda a: jnp.tile(a, (1, W))            # (r, C*) -> (r, W*C*) lane layout
    eye = jnp.eye(W, dtype=jnp.float32)
    return (
        # CBN affine embeddings (consumed OUTSIDE the kernel; gamma = 1 + Wx + b):
        jnp.concatenate([tile(wg1), tile(wb1), tile(wg2), tile(wb2)], axis=1),      # (L, 4*W*C)
        jnp.concatenate([tile(1.0 + bg1), tile(bb1), tile(1.0 + bg2), tile(bb2)], axis=1),
        tile(dw1w), tile(dw1b),                                     # (9, W*C), (1, W*C)
        tile(dw2w), tile(dw2b),
        jnp.kron(eye, p1w).astype(jnp.bfloat16), tile(p1b),         # block-diag (W*C, 2*W*C)
        jnp.kron(eye, p2w).astype(jnp.bfloat16), tile(p2b),         # block-diag (2*W*C, W*C)
    )


def mlpcbn_depthwise_mixer(x_nchw, label, layer_params):
    """Equivalent of MLPCBNDepthWiseMixer.forward.  x_nchw: (N, C, H, W), label: (N, L).

    All layers are fused into one pallas_call (2 layers per grid step); the
    NCHW <-> lane-dense conversion happens once per mixer call, not per layer.
    """
    N, C, H, W = x_nchw.shape
    layers = len(layer_params)
    WC = W * C
    LPS = 2 if layers % 2 == 0 else 1               # layers processed per grid step

    x = jnp.transpose(x_nchw, (0, 2, 3, 1)).reshape(N, H, WC)      # NCHW -> lane-dense

    prepped = [_prep_layer_params(p, W) for p in layer_params]
    stacked = tuple(jnp.stack([pp[i] for pp in prepped], axis=0)   # each (layers, r, c)
                    for i in range(len(prepped[0])))

    # Precompute the conditional affine for all layers in XLA (tiny): (layers, N, 4*W*C).
    cbn_w, cbn_b = stacked[0], stacked[1]
    aff = jnp.einsum('nl,klc->knc', label, cbn_w) + cbn_b
    per_layer_args = (aff,) + stacked[2:]

    sign_sub, sign_lane = _roll_signs()
    kernel = _make_mixer_kernel(C, LPS, sign_sub, sign_lane)

    full = lambda a: pl.BlockSpec(a.shape, lambda l: (0,) * a.ndim)

    def per_layer(a):
        nd = a.ndim
        return pl.BlockSpec((LPS,) + a.shape[1:], lambda l: (l,) + (0,) * (nd - 1))

    # Explicit VMEM budget: activation blocks + double-buffered per-step parameters
    # (+ headroom). Keeps us honest on v7x's 64 MiB physical VMEM.
    act_bytes = x.size * x.dtype.itemsize
    step_bytes = sum((a.size // a.shape[0]) * LPS * a.dtype.itemsize for a in per_layer_args)
    vmem_limit = int(min(max(4 * act_bytes + 4 * step_bytes + (8 << 20), 16 << 20), 48 << 20))

    out = pl.pallas_call(
        kernel,
        out_shape=jax.ShapeDtypeStruct((N, H, WC), jnp.float32),
        grid=(layers // LPS,),
        in_specs=[full(x)] + [per_layer(a) for a in per_layer_args],
        # Constant out index_map: output block stays resident in VMEM across all layers.
        out_specs=pl.BlockSpec((N, H, WC), lambda l: (0, 0, 0)),
        compiler_params=pltpu.CompilerParams(
            # Layer axis is a sequential carry -> "arbitrary". For production shapes add
            # an N/H-parallel axis (with a cross-tile stats reduction) and, on v7x, split
            # it over the two TensorCores.
            dimension_semantics=("arbitrary",),
            vmem_limit_bytes=vmem_limit),
    )(x, *per_layer_args)

    return jnp.transpose(out.reshape(N, H, W, C), (0, 3, 1, 2))    # back to NCHW


# ----------------------------------------------------------------------------- pure-JAX ref
def _reference_block(x, label, p):
    """Pure-JAX NCHW reference for one MLPCBNDepthWiseBlock (same assumed semantics)."""
    (wg1, bg1, wb1, bb1, dw1w, dw1b, dw2w, dw2b,
     wg2, bg2, wb2, bb2, p1w, p1b, p2w, p2b) = p
    N, C, H, W = x.shape

    def cbn(y, wg, bg, wb, bb):
        gamma = 1.0 + label @ wg + bg
        beta = label @ wb + bb
        mean = jnp.mean(y, axis=(0, 2, 3), keepdims=True)
        var = jnp.mean((y - mean) ** 2, axis=(0, 2, 3), keepdims=True)
        y_hat = (y - mean) * jax.lax.rsqrt(var + EPS)
        return gamma[:, :, None, None] * y_hat + beta[:, :, None, None]

    def dw_conv(y, w9, b):
        acc = jnp.broadcast_to(b[0][None, :, None, None], y.shape)
        for i in range(3):
            for j in range(3):
                shifted = jnp.roll(jnp.roll(y, 1 - i, axis=2), 1 - j, axis=3)
                acc = acc + shifted * w9[3 * i + j][None, :, None, None]
        return acc

    skip = x
    y = cbn(x, wg1, bg1, wb1, bb1)
    y = dw_conv(y, dw1w, dw1b)
    y = dw_conv(y, dw2w, dw2b)
    x = y + skip

    skip = x
    y = cbn(x, wg2, bg2, wb2, bb2)
    yf = jnp.transpose(y, (0, 2, 3, 1)).reshape(N * H * W, C)
    h = jax.nn.gelu(yf @ p1w + p1b, approximate=True)
    o = h @ p2w + p2b
    o = jnp.transpose(o.reshape(N, H, W, C), (0, 3, 1, 2))
    return o + skip


def reference_mixer(x, label, layer_params):
    for p in layer_params:
        x = _reference_block(x, label, p)
    return x


# ----------------------------------------------------------------------------- demo params
def init_block_params(key, C, L):
    """Deterministic synthetic parameters for one MLPCBNDepthWiseBlock.

    Natural layouts (relative to PyTorch):
      * depthwise conv weight (C,1,3,3)  -> (9, C): row k = tap (k//3, k%3), col = channel
      * 1x1 conv weight (Cout,Cin,1,1)   -> (Cin, Cout) so y = x @ W (transposed)
      * ConditionalNorm embeddings       -> Linear(L, C) for gamma and for beta
    """
    ks = jax.random.split(key, 10)
    f32 = jnp.float32
    nrm = lambda k, shape, s: jax.random.normal(k, shape, f32) * s
    Ch = 2 * C
    return (
        nrm(ks[0], (L, C), 0.02), jnp.zeros((1, C), f32),          # norm1 gamma embed (W, b)
        nrm(ks[1], (L, C), 0.02), jnp.zeros((1, C), f32),          # norm1 beta  embed
        nrm(ks[2], (9, C), 1.0 / 3.0), nrm(ks[3], (1, C), 0.02),   # depthwise conv1 (w, b)
        nrm(ks[4], (9, C), 1.0 / 3.0), nrm(ks[5], (1, C), 0.02),   # depthwise conv2 (w, b)
        nrm(ks[6], (L, C), 0.02), jnp.zeros((1, C), f32),          # norm2 gamma embed
        nrm(ks[7], (L, C), 0.02), jnp.zeros((1, C), f32),          # norm2 beta  embed
        nrm(ks[8], (C, Ch), C ** -0.5), jnp.zeros((1, Ch), f32),   # 1x1 conv C->2C (w, b)
        nrm(ks[9], (Ch, C), Ch ** -0.5), jnp.zeros((1, C), f32),   # 1x1 conv 2C->C (w, b)
    )


if __name__ == "__main__":
    key = jax.random.PRNGKey(0)
    N, C, H, W = 2, 32, 8, 8      # small config; W*C = 256 keeps the lane axis dense
    L = 16                        # label / condition embedding dim
    LAYERS = 4                    # mixer depth (all fused into one pallas_call)

    kx, kl, kp = jax.random.split(key, 3)
    x = jax.random.normal(kx, (N, C, H, W), jnp.float32)   # NCHW, like the PyTorch module
    label = jax.random.normal(kl, (N, L), jnp.float32)
    layer_params = [init_block_params(k, C, L) for k in jax.random.split(kp, LAYERS)]

    y = mlpcbn_depthwise_mixer(x, label, layer_params)
    y = jax.block_until_ready(y)

    assert y.shape == (N, C, H, W)
    assert bool(jnp.isfinite(y).all())

    # Validate against a pure-JAX reference of the same (assumed) semantics. Tolerance is
    # normalized to the output scale (in-kernel dots use bf16 weights/operands with f32
    # accumulation; the XLA reference uses TPU default f32 matmul precision).
    y_ref = jax.block_until_ready(reference_mixer(x, label, layer_params))
    scale = float(jnp.max(jnp.abs(y_ref))) + 1.0
    err = float(jnp.max(jnp.abs(y - y_ref)))
    assert err / scale < 2e-2, f"kernel/reference mismatch: max abs err {err} (scale {scale})"

    print("KERNEL_OK")
</pallas_src>

<mosaic_0001>
module attributes {stable_mosaic.version = 11 : i64} {
  func.func @probe(%arg0: memref<2x8x256xf32, #tpu.memory_space<vmem>>, %arg1: memref<2x8x256xf32, #tpu.memory_space<vmem>>, %arg2: memref<2x8x256xf32, #tpu.memory_space<vmem>>) attributes {dimension_semantics = [], scalar_prefetch = 0 : i64, scratch_operands = 0 : i64, tpu.core_type = #tpu.core_type<tc>} {
    %c0 = arith.constant 0 : index
    %c0_0 = arith.constant 0 : index
    %c0_1 = arith.constant 0 : index
    %0 = vector.load %arg0[%c0, %c0_0, %c0_1] : memref<2x8x256xf32, #tpu.memory_space<vmem>>, vector<2x8x256xf32>
    %c1_i32 = arith.constant 1 : i32
    %1 = tpu.dynamic_rotate %0 by %c1_i32 dim 1 : vector<2x8x256xf32>, i32 -> vector<2x8x256xf32>
    %c0_2 = arith.constant 0 : index
    %c0_3 = arith.constant 0 : index
    %c0_4 = arith.constant 0 : index
    %2 = vector.load %arg1[%c0_2, %c0_3, %c0_4] : memref<2x8x256xf32, #tpu.memory_space<vmem>>, vector<2x8x256xf32>
    tpu.vector_store %arg1[%c0_2, %c0_3, %c0_4], %1 {strides = array<i32>} : memref<2x8x256xf32, #tpu.memory_space<vmem>>, vector<2x8x256xf32>,
    %c32_i32 = arith.constant 32 : i32
    %3 = tpu.dynamic_rotate %0 by %c32_i32 dim 2 : vector<2x8x256xf32>, i32 -> vector<2x8x256xf32>
    %c0_5 = arith.constant 0 : index
    %c0_6 = arith.constant 0 : index
    %c0_7 = arith.constant 0 : index
    %4 = vector.load %arg2[%c0_5, %c0_6, %c0_7] : memref<2x8x256xf32, #tpu.memory_space<vmem>>, vector<2x8x256xf32>
    tpu.vector_store %arg2[%c0_5, %c0_6, %c0_7], %3 {strides = array<i32>} : memref<2x8x256xf32, #tpu.memory_space<vmem>>, vector<2x8x256xf32>,
    return
  }
}

</mosaic_0001>

<llo_original>
// kernel: tpu_custom_call.1
$region0: #{tpu_custom_call.1}
  #allocation0 [shape = 'u32[]', space=smem, size = 0x4, offset = 0x4, fixed_abs, tag = 'smem constant byte address 0x4 - core index']
  #allocation1 [shape = 'u32[144,128]{1,0:T(1,128)}', space=vmem, size = 0x12000, scoped, tag = 'internal scratch']
  %s0 = inlined_call_operand.hbm [shape: f32[2,8,256], index: 0, kind: input, shape index: {}]
  %s1 = inlined_call_operand.hbm [shape: f32[2,8,256], index: 1, kind: output, shape index: {0}]
  %s2 = inlined_call_operand.hbm [shape: f32[2,8,256], index: 2, kind: output, shape index: {1}]
  %3 = xla_tuple %s1, %s2
  %s4 = sld [smem:[#allocation0]]
  $region26: #{tpu_custom_call.1} parent=0
    _
  %s6 = ssub.s32 1, %s4
  %s7 = scalar_select 0, %s6, %s4
  $region1: #{tpu_custom_call.1} parent=0
    #allocation2 [shape = 'u8[16384]{0}', space=vmem, size = 0x4000, scoped, tag = 'input window, operand 0, single buffered']
    #allocation3 [shape = 's32[1]{0}', space=sflag, size = 0x4, scoped, tag = 'scoped memory for tpu_custom_call.1']
    #allocation4 [shape = 's32[1]{0}', space=sflag, size = 0x4, scoped, tag = 'scoped memory for tpu_custom_call.1']
    #allocation5 [shape = 'u8[16384]{0}', space=vmem, size = 0x4000, scoped, tag = 'output window, operand 0, single buffered']
    #allocation6 [shape = 'u8[16384]{0}', space=vmem, size = 0x4000, scoped, tag = 'output window, operand 1, single buffered']
    #allocation7 [shape = 's32[1]{0}', space=sflag, size = 0x4, scoped, tag = 'scoped memory for tpu_custom_call.1']
    %8 = vsyncpa [#allocation3], 0
    %9 = vsyncpa [#allocation4], 0
    %10 = vsyncpa [#allocation7], 0
    // Predicated region
    $region2: #{tpu_custom_call.1} parent=1 // pred_check
      _
    $region3: #{tpu_custom_call.1} parent=1 // pred_check_branch
      %12 = sbr.rel (0) target = $region5
    $region4: #{tpu_custom_call.1} parent=1 // pred_region
      %s14 = ssub.s32 512, 512
      %15 = vsyncadd [#allocation3], %s14
      %s16 = sshll.u32 [#allocation2], 4
      %s17 = int_to_ptr.vmem [resolvable:$true] %s16
      %22 = dma.hbm_to_vmem [thread:$0]  %s0, 512, %s17, [#allocation3], 256, 256, 16
    $region5: #{tpu_custom_call.1} parent=1 // pred_fallthru
      _
    // Predicated region
    $region6: #{tpu_custom_call.1} parent=1 // pred_check
      _
    $region7: #{tpu_custom_call.1} parent=1 // pred_check_branch
      %24 = sbr.rel (0) target = $region9
    $region8: #{tpu_custom_call.1} parent=1 // pred_region
      %25 = dma.done [#allocation3], 512
    $region9: #{tpu_custom_call.1} parent=1 // pred_fallthru
      _
    %v26 = vld [vmem:[#allocation2] sm:$0xff]
    %v27 = vld [vmem:[#allocation2 + $0x8] sm:$0xff]
    %v28 = vld [vmem:[#allocation2 + $0x10] sm:$0xff]
    %v29 = vld [vmem:[#allocation2 + $0x18] sm:$0xff]
    %v30 = vrot.slane %v26, 7
    %v31 = vrot.slane %v27, 7
    %v32 = vrot.slane %v28, 7
    %v33 = vrot.slane %v29, 7
    %34 = vst [vmem:[#allocation5] sm:$0xff] %v30
    %35 = vst [vmem:[#allocation5 + $0x8] sm:$0xff] %v31
    %36 = vst [vmem:[#allocation5 + $0x10] sm:$0xff] %v32
    %37 = vst [vmem:[#allocation5 + $0x18] sm:$0xff] %v33
    %38 = vrot.lane.b32.xlu0 %v26, 32
    %v39 = vpop.permute.xlu0 %38
    %40 = vrot.lane.b32.xlu0 %v28, 32
    %v41 = vpop.permute.xlu0 %40
    %42 = vrot.lane.b32.xlu0 %v27, 32
    %v43 = vpop.permute.xlu0 %42
    %44 = vrot.lane.b32.xlu0 %v29, 32
    %v45 = vpop.permute.xlu0 %44
    %v46 = vlaneseq
    %v47 = vand.u32 %v46, 127
    %vm48 = vcmp.lt.s32.totalorder %v47, 32
    %v49 = vsel %vm48, %v39, %v43
    %v50 = vsel %vm48, %v41, %v45
    %v51 = vsel %vm48, %v43, %v39
    %v52 = vsel %vm48, %v45, %v41
    %53 = vst [vmem:[#allocation6] sm:$0xff] %v51
    %54 = vst [vmem:[#allocation6 + $0x8] sm:$0xff] %v49
    %55 = vst [vmem:[#allocation6 + $0x10] sm:$0xff] %v52
    %56 = vst [vmem:[#allocation6 + $0x18] sm:$0xff] %v50
    // Predicated region
    $region10: #{tpu_custom_call.1} parent=1 // pred_check
      _
    $region11: #{tpu_custom_call.1} parent=1 // pred_check_branch
      %58 = sbr.rel (0) target = $region13
    $region12: #{tpu_custom_call.1} parent=1 // pred_region
      %s60 = ssub.s32 512, 512
      %61 = vsyncadd [#allocation4], %s60
      %s62 = sshll.u32 [#allocation5], 4
      %s63 = int_to_ptr.vmem [resolvable:$true] %s62
      %68 = dma.vmem_to_hbm [thread:$0]  %s63, 512, %s1, [#allocation4], 256, 256, 16
    $region13: #{tpu_custom_call.1} parent=1 // pred_fallthru
      _
    // Predicated region
    $region14: #{tpu_custom_call.1} parent=1 // pred_check
      _
    $region15: #{tpu_custom_call.1} parent=1 // pred_check_branch
      %70 = sbr.rel (0) target = $region17
    $region16: #{tpu_custom_call.1} parent=1 // pred_region
      %s72 = ssub.s32 512, 512
      %73 = vsyncadd [#allocation7], %s72
      %s74 = sshll.u32 [#allocation6], 4
      %s75 = int_to_ptr.vmem [resolvable:$true] %s74
      %80 = dma.vmem_to_hbm [thread:$0]  %s75, 512, %s2, [#allocation7], 256, 256, 16
    $region17: #{tpu_custom_call.1} parent=1 // pred_fallthru
      _
    // Predicated region
    $region18: #{tpu_custom_call.1} parent=1 // pred_check
      _
    $region19: #{tpu_custom_call.1} parent=1 // pred_check_branch
      %82 = sbr.rel (0) target = $region21
    $region20: #{tpu_custom_call.1} parent=1 // pred_region
      %83 = dma.done [#allocation4], 512
    $region21: #{tpu_custom_call.1} parent=1 // pred_fallthru
      _
    // Predicated region
    $region22: #{tpu_custom_call.1} parent=1 // pred_check
      _
    $region23: #{tpu_custom_call.1} parent=1 // pred_check_branch
      %85 = sbr.rel (0) target = $region25
    $region24: #{tpu_custom_call.1} parent=1 // pred_region
      %86 = dma.done [#allocation7], 512
    $region25: #{tpu_custom_call.1} parent=1 // pred_fallthru
      _
    %87 = vsyncpa [#allocation3], 1
    %88 = vsyncpa [#allocation4], 1
    %89 = vsyncpa [#allocation7], 1

</llo_original>
